<compile_context>
chip_gen: v7x
topology: tpu7x:2x2x1
jax: 0.10.0
libtpu: 0.0.40
codegen_flags: <defaults>
</compile_context>

<pallas_src>
import functools

import jax
import jax.numpy as jnp
from jax.experimental import pallas as pl
from jax.experimental.pallas import tpu as pltpu


def _unnormalize_kernel(x_ref, s_ref, c_ref, o_ref):
    # x_ref / o_ref: (tr, tl) tile.  s_ref / c_ref: (tr, 1) or (1, tl) f32
    # tile that broadcasts against it.  Affine in f32, single round to dtype.
    y = x_ref[...].astype(jnp.float32) * s_ref[...] + c_ref[...]
    if jnp.issubdtype(o_ref.dtype, jnp.integer):
        y = jnp.round(y)          # round-to-nearest instead of f32 truncation
    o_ref[...] = y.astype(o_ref.dtype)


@functools.partial(jax.jit, static_argnames=("target_block_bytes",))
def unnormalize(x, scale, center, *, target_block_bytes=4 * 1024 * 1024):
    """out = x * scale + center with per-channel broadcast.

    x: (N, C, H, W); scale, center: (C,).  Output has x's shape/dtype; the
    affine is computed in f32 (single rounding to the output dtype).
    """
    N, C, H, W = x.shape
    HW = H * W
    itemsize = jnp.dtype(x.dtype).itemsize
    # Sublane packing: 8 rows/vreg for 32-bit, 16 for bf16, 32 for int8/fp8.
    packing = 8 * max(1, 4 // itemsize)

    # ---- pick a lane-dense 2-D layout (reshape is free: no HBM copy) ------
    col_scale = HW >= 128
    if col_scale:
        # rows = N*C with a per-row scale column, lanes = H*W.
        R, L = N * C, HW
        x2 = x.reshape(R, L)
        s2 = jnp.tile(scale.astype(jnp.float32), (N,)).reshape(R, 1)
        c2 = jnp.tile(center.astype(jnp.float32), (N,)).reshape(R, 1)
    else:
        # Lane-sparse H*W: rows = N, lanes = C*H*W, scale/center as row
        # vectors (channel value repeated H*W times) -> full 128-lane density.
        R, L = N, C * HW
        x2 = x.reshape(R, L)
        s2 = jnp.repeat(scale.astype(jnp.float32), HW).reshape(1, L)
        c2 = jnp.repeat(center.astype(jnp.float32), HW).reshape(1, L)

    # ---- lane blocking: full L if a minimal row slab fits the block budget,
    #      else equal 128-aligned chunks (edge over-read < 128, masked). -----
    tl_max = max(128, (target_block_bytes // (packing * itemsize)) // 128 * 128)
    if L <= tl_max:
        tl = L                                   # full lane extent: always legal
    else:
        n_chunks = pl.cdiv(L, tl_max)
        tl = pl.cdiv(pl.cdiv(L, 128), n_chunks) * 128

    # ---- row blocking: ~target_block_bytes per x block ---------------------
    tr = max(packing, (target_block_bytes // (tl * itemsize)) // packing * packing)
    if tr >= R:
        tr = R                                   # single full-extent row block

    grid_r, grid_l = pl.cdiv(R, tr), pl.cdiv(L, tl)

    # ---- megacore: ensure >=2 parallel blocks when the shape allows it -----
    if grid_r * grid_l == 1:
        if R > packing:
            tr = pl.cdiv(pl.cdiv(R, packing), 2) * packing
            grid_r = pl.cdiv(R, tr)
        elif L > 128:
            tl = pl.cdiv(pl.cdiv(L, 128), 2) * 128
            grid_l = pl.cdiv(L, tl)

    # Larger grid axis first so megacore sharding actually distributes work.
    lanes_major = grid_l > grid_r
    if lanes_major:
        grid = (grid_l, grid_r)
        x_map = lambda j, i: (i, j)
        sc_map = (lambda j, i: (i, 0)) if col_scale else (lambda j, i: (0, j))
    else:
        grid = (grid_r, grid_l)
        x_map = lambda i, j: (i, j)
        sc_map = (lambda i, j: (i, 0)) if col_scale else (lambda i, j: (0, j))
    sc_block = (tr, 1) if col_scale else (1, tl)

    # No wrapper-side padding: non-dividing edges are handled by Pallas's
    # masked edge blocks, so x is read once and the output written once.
    out2 = pl.pallas_call(
        _unnormalize_kernel,
        out_shape=jax.ShapeDtypeStruct((R, L), x.dtype),
        grid_spec=pltpu.PrefetchScalarGridSpec(
            num_scalar_prefetch=0,
            grid=grid,
            in_specs=[
                pl.BlockSpec((tr, tl), x_map),     # x tile (~4 MiB)
                pl.BlockSpec(sc_block, sc_map),    # scale tile (tiny DMA)
                pl.BlockSpec(sc_block, sc_map),    # center tile (tiny DMA)
            ],
            out_specs=pl.BlockSpec((tr, tl), x_map),
        ),
        cost_estimate=pl.CostEstimate(
            flops=2 * R * L,
            transcendentals=0,
            bytes_accessed=2 * R * L * itemsize,
        ),
        compiler_params=pltpu.CompilerParams(
            dimension_semantics=("parallel", "parallel"),
            # Double-buffered ~4 MiB in + out blocks << 48 MiB; comfortably
            # within v5e/v6e (128 MiB physical) and leaves slack on v7x (64).
            vmem_limit_bytes=48 * 1024 * 1024,
        ),
    )(x2, s2, c2)

    return out2.reshape(N, C, H, W)


if __name__ == "__main__":
    key = jax.random.PRNGKey(0)
    k0, k1, k2 = jax.random.split(key, 3)

    def ref_fn(x, scale, center):
        C = x.shape[1]
        y = (x.astype(jnp.float32) * scale.reshape(1, C, 1, 1)
             + center.reshape(1, C, 1, 1))
        return y.astype(x.dtype)

    # Primary case (module's typical image input).
    N, C, H, W = 2, 4, 16, 16
    x = jax.random.normal(k0, (N, C, H, W), dtype=jnp.float32)
    scale = jnp.asarray([0.229, 0.224, 0.225, 0.25], dtype=jnp.float32)    # (C,)
    center = jnp.asarray([0.485, 0.456, 0.406, 0.5], dtype=jnp.float32)    # (C,)
    out = unnormalize(x, scale, center)
    jax.block_until_ready(out)
    assert out.shape == x.shape and out.dtype == x.dtype
    assert jnp.allclose(out, ref_fn(x, scale, center), atol=1e-6, rtol=1e-6)

    # Lane-sparse, non-dividing case (H*W < 128 -> (N, C*H*W) layout).
    xb = jax.random.normal(k1, (1, 3, 5, 7), dtype=jnp.float32)
    sb = jnp.asarray([0.5, 2.0, -1.25], dtype=jnp.float32)
    cb = jnp.asarray([0.1, -0.2, 0.3], dtype=jnp.float32)
    ob = unnormalize(xb, sb, cb)
    assert jnp.allclose(ob, ref_fn(xb, sb, cb), atol=1e-6, rtol=1e-6)

    # Lane-dense, non-dividing case (masked edge blocks on both dims).
    xc = jax.random.normal(k2, (1, 3, 20, 20), dtype=jnp.float32)
    oc = unnormalize(xc, sb, cb)
    assert jnp.allclose(oc, ref_fn(xc, sb, cb), atol=1e-6, rtol=1e-6)

    # bf16 path (f32 compute, single round to bf16).
    xd = x.astype(jnp.bfloat16)
    od = unnormalize(xd, scale, center)
    assert od.dtype == jnp.bfloat16
    assert jnp.allclose(od.astype(jnp.float32),
                        ref_fn(xd, scale, center).astype(jnp.float32),
                        atol=1e-2, rtol=1e-2)

    jax.block_until_ready((out, ob, oc, od))
    print("KERNEL_OK")
</pallas_src>

<mosaic_0001>
module attributes {stable_mosaic.version = 11 : i64} {
  func.func @_unnormalize_kernel(%arg0: i32, %arg1: i32, %arg2: memref<8x128xf32, #tpu.memory_space<vmem>>, %arg3: memref<8x1xf32, #tpu.memory_space<vmem>>, %arg4: memref<8x1xf32, #tpu.memory_space<vmem>>, %arg5: memref<8x128xf32, #tpu.memory_space<vmem>>) attributes {dimension_semantics = [#tpu.dimension_semantics<parallel>, #tpu.dimension_semantics<parallel>], iteration_bounds = array<i64: 2, 1>, scalar_prefetch = 0 : i64, scratch_operands = 0 : i64, tpu.core_type = #tpu.core_type<tc>, window_params = [{transform_indices = @transform_0, window_bounds = array<i64: 8, 128>}, {transform_indices = @transform_1, window_bounds = array<i64: 8, 1>}, {transform_indices = @transform_2, window_bounds = array<i64: 8, 1>}, {transform_indices = @transform_3, window_bounds = array<i64: 8, 128>}]} {
    %c0 = arith.constant 0 : index
    %c0_0 = arith.constant 0 : index
    %0 = vector.load %arg2[%c0, %c0_0] : memref<8x128xf32, #tpu.memory_space<vmem>>, vector<8x128xf32>
    %c0_1 = arith.constant 0 : index
    %c0_2 = arith.constant 0 : index
    %1 = vector.load %arg3[%c0_1, %c0_2] : memref<8x1xf32, #tpu.memory_space<vmem>>, vector<8x1xf32>
    %2 = vector.broadcast %1 : vector<8x1xf32> to vector<8x128xf32>
    %3 = arith.mulf %0, %2 : vector<8x128xf32>
    %c0_3 = arith.constant 0 : index
    %c0_4 = arith.constant 0 : index
    %4 = vector.load %arg4[%c0_3, %c0_4] : memref<8x1xf32, #tpu.memory_space<vmem>>, vector<8x1xf32>
    %5 = vector.broadcast %4 : vector<8x1xf32> to vector<8x128xf32>
    %6 = arith.addf %3, %5 : vector<8x128xf32>
    %c0_5 = arith.constant 0 : index
    %c0_6 = arith.constant 0 : index
    %7 = vector.load %arg5[%c0_5, %c0_6] : memref<8x128xf32, #tpu.memory_space<vmem>>, vector<8x128xf32>
    tpu.vector_store %arg5[%c0_5, %c0_6], %6 {strides = array<i32>} : memref<8x128xf32, #tpu.memory_space<vmem>>, vector<8x128xf32>,
    return
  }
  func.func @transform_0(%arg0: i32, %arg1: i32) -> (i32, i32) {
    %c0_i32 = arith.constant 0 : i32
    return %arg1, %arg0 : i32, i32
  }
  func.func @transform_1(%arg0: i32, %arg1: i32) -> (i32, i32) {
    %c0_i32 = arith.constant 0 : i32
    %c0_i32_0 = arith.constant 0 : i32
    return %arg1, %c0_i32 : i32, i32
  }
  func.func @transform_2(%arg0: i32, %arg1: i32) -> (i32, i32) {
    %c0_i32 = arith.constant 0 : i32
    %c0_i32_0 = arith.constant 0 : i32
    return %arg1, %c0_i32 : i32, i32
  }
  func.func @transform_3(%arg0: i32, %arg1: i32) -> (i32, i32) {
    %c0_i32 = arith.constant 0 : i32
    return %arg1, %arg0 : i32, i32
  }
}

</mosaic_0001>

<llo_original>
// kernel: tile.1
$region0: #{tile.1}
  %s0 = inlined_call_operand.vmem [shape: f32[2,4], index: 0, kind: input, shape index: {}]
  %s1 = inlined_call_operand.vmem [shape: f32[8,1], index: 1, kind: output, shape index: {}]
  $region1: #{tile.1} parent=0
    #allocation0 [shape = 'u8[4096]{0}', space=vmem, size = 0x1000, scoped, tag = 'scoped mem for input reshape']
    %s3 = sshllo.u32 0, 2
    %v4 = vld [vmem:[%s0] sm:%s3]
    %5 = vst [vmem:[#allocation0] sm:%s3] %v4
    %v6 = vld [vmem:[#allocation0] sm:$0x3]
    %vm7 = vcmask 7168
    %8 = vst.msk [vmem:[%s1] ss:$4 sm:$0x3] %vm7, %v6
    %v9 = vld [vmem:[#allocation0] sm:$0x3]
    %10 = vrot.lane.b32.xlu0 %v9, 127
    %v11 = vpop.permute.xlu0 %10
    %vm12 = vcmask 7168
    %s13 = scalar_lea.vmem %s1, 1
    %14 = vst.msk [vmem:[%s13] ss:$4 sm:$0x3] %vm12, %v11
    %v15 = vld [vmem:[#allocation0] sm:$0x3]
    %16 = vrot.lane.b32.xlu0 %v15, 126
    %v17 = vpop.permute.xlu0 %16
    %vm18 = vcmask 7168
    %s19 = scalar_lea.vmem %s1, 2
    %20 = vst.msk [vmem:[%s19] ss:$4 sm:$0x3] %vm18, %v17
    %v21 = vld [vmem:[#allocation0] sm:$0x3]
    %22 = vrot.lane.b32.xlu0 %v21, 125
    %v23 = vpop.permute.xlu0 %22
    %vm24 = vcmask 7168
    %s25 = scalar_lea.vmem %s1, 3
    %26 = vst.msk [vmem:[%s25] ss:$4 sm:$0x3] %vm24, %v23

// kernel: tile.13
$region0: #{tile.13}
  #allocation0 [shape = 's32[1]{0}', space=sflag, size = 0x4, scoped, tag = 'scoped memory for tile.13']
  %s0 = inlined_call_operand.vmem [shape: f32[4], index: 0, kind: input, shape index: {}]
  %s1 = inlined_call_operand.vmem [shape: f32[2,4], index: 1, kind: output, shape index: {}]
  // Predicated region
  $region2: #{tile.13} parent=0 // pred_check
    _
  $region3: #{tile.13} parent=0 // pred_check_branch
    %3 = sbr.rel (0) target = $region5
  $region4: #{tile.13} parent=0 // pred_region
    _
  $region5: #{tile.13} parent=0 // pred_fallthru
    _
  %v4 = vld [vmem:[%s0] ss:$0 sm:$0xff]
  %5 = vst [vmem:[%s1] sm:$0x3] %v4

// kernel: unnormalize.1
$region0: #{unnormalize.1}
  #allocation0 [shape = 'u32[]', space=smem, size = 0x4, offset = 0x4, fixed_abs, tag = 'smem constant byte address 0x4 - core index']
  #allocation1 [shape = 'u32[144,128]{1,0:T(1,128)}', space=vmem, size = 0x12000, scoped, tag = 'internal scratch']
  %s0 = inlined_call_operand.vmem [shape: f32[8,256], index: 0, kind: input, shape index: {}]
  %s1 = inlined_call_operand.vmem [shape: f32[8,1], index: 1, kind: input, shape index: {}]
  %s2 = inlined_call_operand.vmem [shape: f32[8,1], index: 2, kind: input, shape index: {}]
  %s3 = inlined_call_operand.vmem [shape: f32[8,256], index: 3, kind: output, shape index: {}]
  %s4 = sld [smem:[#allocation0]]
  $region45: #{unnormalize.1} parent=0
    _
  %s6 = ssub.s32 1, %s4
  %s7 = scalar_select 0, %s6, %s4
  loop: start=0, step=1, limit=4
  $region2: #{unnormalize.1} parent=0 // loop_pre_header
    _
  $region3: #{unnormalize.1} parent=0 // loop_header
    %s9 = sphi 0, %s13
    %p10 = scmp.ge.s32.totalorder %s9, 4
    %s16 = sphi 0, %s28
    %s17 = sphi 0, %s24
    %s18 = sphi 0, %s16
    %s19 = sphi 0, %s17
    %s20 = sphi 0, %s18
    %s21 = sphi 0, %s19
    %s33 = sphi 0, %s35
    %s36 = sphi 0, %s33
    %s37 = sphi 0, %s36
    %s53 = sphi 0, %s37
    %s59 = sphi 0, %s61
    %s62 = sphi 0, %s59
    %s63 = sphi 0, %s62
    %s79 = sphi 0, %s63
    %s85 = sphi 0, %s87
    %s88 = sphi 0, %s85
    %s89 = sphi 0, %s88
    %s105 = sphi 0, %s89
    %s113 = sphi 0, %s115
    %s116 = sphi 0, %s113
    %s117 = sphi 0, %s116
    %s133 = sphi 0, %s117
  $region4: #{unnormalize.1} parent=0 // loop_header_branch
    %12 = sbr.rel (%p10) target = $region8
  $region5: #{unnormalize.1} parent=0 // loop_body
    %s14 = ssub.s32 %s9, 1
    %s15 = ssub.s32 %s9, 2
    %s22 = sadd.s32 1, %s17
    %p23 = scmp.ge.s32.totalorder %s22, 1
    %s24 = scalar_select %p23, 0, %s22
    %s25 = sadd.s32 1, %s16
    %s26 = scalar_select %p23, %s25, %s16
    %p27 = scmp.ge.s32.totalorder %s26, 2
    %s28 = scalar_select %p27, 0, %s26
    %s29 = ssub.s32 %s17, %s24
    %s30 = ssub.s32 %s16, %s28
    %s31 = sor.u32 %s29, %s30
    %p32 = scmp.eq.s32.totalorder %s31, 0
    %s34 = sadd.s32 %s33, 1
    %s35 = scalar_select %p32, %s33, %s34
    %p38 = pneg %p32
    %p39 = scmp.eq.s32.totalorder %s9, 1
    %p40 = por %p38, %p39
    %p41 = scmp.ne.s32.totalorder %s33, %s36
    %p42 = scmp.eq.s32.totalorder %s9, 0
    %p43 = por %p41, %p42
    %p44 = scmp.ne.s32.totalorder %s33, %s36
    %p45 = scmp.eq.s32.totalorder %s14, 1
    %p46 = por %p44, %p45
    %p47 = scmp.ne.s32.totalorder %s36, %s37
    %p48 = scmp.eq.s32.totalorder %s14, 0
    %p49 = por %p47, %p48
    %p50 = scmp.ne.s32.totalorder %s36, %s37
    %p51 = scmp.eq.s32.totalorder %s15, 1
    %p52 = por %p50, %p51
    %p54 = scmp.ne.s32.totalorder %s37, %s53
    %p55 = scmp.eq.s32.totalorder %s15, 0
    %p56 = por %p54, %p55
    %s57 = ssub.s32 %s17, %s24
    %p58 = scmp.eq.s32.totalorder %s57, 0
    %s60 = sadd.s32 %s59, 1
    %s61 = scalar_select %p58, %s59, %s60
    %p64 = pneg %p58
    %p65 = scmp.eq.s32.totalorder %s9, 1
    %p66 = por %p64, %p65
    %p67 = scmp.ne.s32.totalorder %s59, %s62
    %p68 = scmp.eq.s32.totalorder %s9, 0
    %p69 = por %p67, %p68
    %p70 = scmp.ne.s32.totalorder %s59, %s62
    %p71 = scmp.eq.s32.totalorder %s14, 1
    %p72 = por %p70, %p71
    %p73 = scmp.ne.s32.totalorder %s62, %s63
    %p74 = scmp.eq.s32.totalorder %s14, 0
    %p75 = por %p73, %p74
    %p76 = scmp.ne.s32.totalorder %s62, %s63
    %p77 = scmp.eq.s32.totalorder %s15, 1
    %p78 = por %p76, %p77
    %p80 = scmp.ne.s32.totalorder %s63, %s79
    %p81 = scmp.eq.s32.totalorder %s15, 0
    %p82 = por %p80, %p81
    %s83 = ssub.s32 %s17, %s24
    %p84 = scmp.eq.s32.totalorder %s83, 0
    %s86 = sadd.s32 %s85, 1
    %s87 = scalar_select %p84, %s85, %s86
    %p90 = pneg %p84
    %p91 = scmp.eq.s32.totalorder %s9, 1
    %p92 = por %p90, %p91
    %p93 = scmp.ne.s32.totalorder %s85, %s88
    %p94 = scmp.eq.s32.totalorder %s9, 0
    %p95 = por %p93, %p94
    %p96 = scmp.ne.s32.totalorder %s85, %s88
    %p97 = scmp.eq.s32.totalorder %s14, 1
    %p98 = por %p96, %p97
    %p99 = scmp.ne.s32.totalorder %s88, %s89
    %p100 = scmp.eq.s32.totalorder %s14, 0
    %p101 = por %p99, %p100
    %p102 = scmp.ne.s32.totalorder %s88, %s89
    %p103 = scmp.eq.s32.totalorder %s15, 1
    %p104 = por %p102, %p103
    %p106 = scmp.ne.s32.totalorder %s89, %s105
    %p107 = scmp.eq.s32.totalorder %s15, 0
    %p108 = por %p106, %p107
    %s109 = ssub.s32 %s17, %s24
    %s110 = ssub.s32 %s16, %s28
    %s111 = sor.u32 %s109, %s110
    %p112 = scmp.eq.s32.totalorder %s111, 0
    %s114 = sadd.s32 %s113, 1
    %s115 = scalar_select %p112, %s113, %s114
    %p118 = pneg %p112
    %p119 = scmp.eq.s32.totalorder %s9, 1
    %p120 = por %p118, %p119
    %p121 = scmp.ne.s32.totalorder %s113, %s116
    %p122 = scmp.eq.s32.totalorder %s9, 0
    %p123 = por %p121, %p122
    %p124 = scmp.ne.s32.totalorder %s113, %s116
    %p125 = scmp.eq.s32.totalorder %s14, 1
    %p126 = por %p124, %p125
    %p127 = scmp.ne.s32.totalorder %s116, %s117
    %p128 = scmp.eq.s32.totalorder %s14, 0
    %p129 = por %p127, %p128
    %p130 = scmp.ne.s32.totalorder %s116, %s117
    %p131 = scmp.eq.s32.totalorder %s15, 1
    %p132 = por %p130, %p131
    %p134 = scmp.ne.s32.totalorder %s117, %s133
    %p135 = scmp.eq.s32.totalorder %s15, 0
    %p136 = por %p134, %p135
    %p137 = scmp.le.s32.totalorder 1, %s9
    %p138 = scmp.lt.s32.totalorder %s9, 3
    %p139 = pnand %p137, %p138
    %p140 = pneg %p139
    // Predicated region
    $region9: #{unnormalize.1} parent=5 // pred_check
      _
    $region10: #{unnormalize.1} parent=5 // pred_check_branch
      %142 = sbr.rel (%p139) target = $region12
    $region11: #{unnormalize.1} parent=5 // pred_region
      %s143 = ssub.s32 %s9, 1
      // Predicated region
      $region13: #{unnormalize.1} parent=11 // pred_check
        %p144 = pneg %p75
      $region14: #{unnormalize.1} parent=11 // pred_check_branch
        %146 = sbr.rel (%p144) target = $region16
      $region15: #{unnormalize.1} parent=11 // pred_region
        %p147 = scmp.lt.s32.totalorder %s19, 0
        %s148 = scalar_select %p147, %s19, 0
        %s149 = smul.addr %s148, 8
        %s150 = scalar_lea.vmem %s1, %s149
      $region16: #{unnormalize.1} parent=11 // pred_fallthru
        _
      // Predicated region
      $region17: #{unnormalize.1} parent=11 // pred_check
        %p151 = pneg %p101
      $region18: #{unnormalize.1} parent=11 // pred_check_branch
        %153 = sbr.rel (%p151) target = $region20
      $region19: #{unnormalize.1} parent=11 // pred_region
        %p154 = scmp.lt.s32.totalorder %s19, 0
        %s155 = scalar_select %p154, %s19, 0
        %s156 = smul.addr %s155, 8
        %s157 = scalar_lea.vmem %s2, %s156
      $region20: #{unnormalize.1} parent=11 // pred_fallthru
        _
    $region12: #{unnormalize.1} parent=5 // pred_fallthru
      _
    %p158 = scmp.lt.s32.totalorder %s9, 2
    // Predicated region
    $region21: #{unnormalize.1} parent=5 // pred_check
      %p159 = pneg %p158
    $region22: #{unnormalize.1} parent=5 // pred_check_branch
      %161 = sbr.rel (%p159) target = $region24
    $region23: #{unnormalize.1} parent=5 // pred_region
      // Predicated region
      $region25: #{unnormalize.1} parent=23 // pred_check
        %p162 = pneg %p43
      $region26: #{unnormalize.1} parent=23 // pred_check_branch
        %164 = sbr.rel (%p162) target = $region28
      $region27: #{unnormalize.1} parent=23 // pred_region
        %p165 = scmp.lt.s32.totalorder %s17, 0
        %s166 = scalar_select %p165, %s17, 0
        %p167 = scmp.lt.s32.totalorder %s16, 1
        %s168 = scalar_select %p167, %s16, 1
        %s169 = smul.addr %s166, 2
        %s170 = sadd.s32 %s168, %s169
        %s171 = smul.addr %s170, 8
        %s172 = scalar_lea.vmem %s0, %s171
      $region28: #{unnormalize.1} parent=23 // pred_fallthru
        _
    $region24: #{unnormalize.1} parent=5 // pred_fallthru
      _
    %p173 = scmp.le.s32.totalorder 1, %s9
    %p174 = scmp.lt.s32.totalorder %s9, 3
    %p175 = pnand %p173, %p174
    %p176 = pneg %p175
    // Predicated region
    $region29: #{unnormalize.1} parent=5 // pred_check
      _
    $region30: #{unnormalize.1} parent=5 // pred_check_branch
      %178 = sbr.rel (%p175) target = $region32
    $region31: #{unnormalize.1} parent=5 // pred_region
      %s179 = ssub.s32 %s9, 1
      %p180 = scmp.lt.s32.totalorder %s19, 0
      %s181 = scalar_select %p180, %s19, 0
      %p182 = scmp.lt.s32.totalorder %s18, 1
      %s183 = scalar_select %p182, %s18, 1
      %s184 = smul.addr %s181, 2
      %s185 = sadd.s32 %s183, %s184
      %s186 = smul.addr %s185, 8
      %s187 = scalar_lea.vmem %s0, %s186
      %p188 = pneg %p49
      %p189 = pneg %p46
      %p190 = scmp.lt.s32.totalorder %s19, 0
      %s191 = scalar_select %p190, %s19, 0
      %s192 = smul.addr %s191, 8
      %s193 = scalar_lea.vmem %s1, %s192
      %p194 = pneg %p75
      %p195 = pneg %p72
      %p196 = scmp.lt.s32.totalorder %s19, 0
      %s197 = scalar_select %p196, %s19, 0
      %s198 = smul.addr %s197, 8
      %s199 = scalar_lea.vmem %s2, %s198
      %p200 = pneg %p101
      %p201 = pneg %p98
      %p202 = pneg %p129
      %p203 = pneg %p126
      %p204 = scmp.lt.s32.totalorder %s19, 0
      %s205 = scalar_select %p204, %s19, 0
      %p206 = scmp.lt.s32.totalorder %s18, 1
      %s207 = scalar_select %p206, %s18, 1
      %s208 = smul.addr %s205, 2
      %s209 = sadd.s32 %s207, %s208
      %s210 = smul.addr %s209, 8
      %s211 = scalar_lea.vmem %s3, %s210
      %p212 = scmp.lt.s32.totalorder %s19, 0
      %s213 = scalar_select %p212, %s19, 0
      %p214 = scmp.lt.s32.totalorder %s18, 1
      %s215 = scalar_select %p214, %s18, 1
      %s216 = smul.addr %s213, 2
      %s217 = sadd.s32 %s215, %s216
      %s218 = smul.addr %s217, 8
      %s219 = scalar_lea.vmem %s0, %s218
      %p220 = scmp.lt.s32.totalorder %s19, 0
      %s221 = scalar_select %p220, %s19, 0
      %s222 = smul.addr %s221, 8
      %s223 = scalar_lea.vmem %s1, %s222
      %p224 = scmp.lt.s32.totalorder %s19, 0
      %s225 = scalar_select %p224, %s19, 0
      %s226 = smul.addr %s225, 8
      %s227 = scalar_lea.vmem %s2, %s226
      %p228 = scmp.lt.s32.totalorder %s19, 0
      %s229 = scalar_select %p228, %s19, 0
      %p230 = scmp.lt.s32.totalorder %s18, 1
      %s231 = scalar_select %p230, %s18, 1
      %s232 = smul.addr %s229, 2
      %s233 = sadd.s32 %s231, %s232
      %s234 = smul.addr %s233, 8
      %s235 = scalar_lea.vmem %s3, %s234
      %v236 = vld [vmem:[%s219] sm:$0xff]
      %v237 = vld [vmem:[%s223] sm:$0xff]
      %239 = vset.pattern.permute.xlu0 0
      %240 = vperm.xlu0 %239, %v237
      %v241 = vpop.permute.xlu0 %240
      %v243 = vmul.f32 %v236, %v241
      %v244 = vld [vmem:[%s227] sm:$0xff]
      %246 = vset.pattern.permute.xlu0 0
      %247 = vperm.xlu0 %246, %v244
      %v248 = vpop.permute.xlu0 %247
      %v250 = vadd.f32 %v243, %v248
      %251 = vst [vmem:[%s235] sm:$0xff] %v250
      %p252 = scmp.lt.s32.totalorder %s19, 0
      %s253 = scalar_select %p252, %s19, 0
      %p254 = scmp.lt.s32.totalorder %s18, 1
      %s255 = scalar_select %p254, %s18, 1
      %s256 = smul.addr %s253, 2
      %s257 = sadd.s32 %s255, %s256
      %s258 = smul.addr %s257, 8
      %s259 = scalar_lea.vmem %s3, %s258
      // Predicated region
      $region33: #{unnormalize.1} parent=31 // pred_check
        %p260 = pneg %p126
      $region34: #{unnormalize.1} parent=31 // pred_check_branch
        %262 = sbr.rel (%p260) target = $region36
      $region35: #{unnormalize.1} parent=31 // pred_region
        _
      $region36: #{unnormalize.1} parent=31 // pred_fallthru
        _
    $region32: #{unnormalize.1} parent=5 // pred_fallthru
      _
    %p263 = scmp.le.s32.totalorder 2, %s9
    // Predicated region
    $region37: #{unnormalize.1} parent=5 // pred_check
      %p264 = pneg %p263
    $region38: #{unnormalize.1} parent=5 // pred_check_branch
      %266 = sbr.rel (%p264) target = $region40
    $region39: #{unnormalize.1} parent=5 // pred_region
      %s267 = ssub.s32 %s9, 2
      // Predicated region
      $region41: #{unnormalize.1} parent=39 // pred_check
        %p268 = pneg %p132
      $region42: #{unnormalize.1} parent=39 // pred_check_branch
        %270 = sbr.rel (%p268) target = $region44
      $region43: #{unnormalize.1} parent=39 // pred_region
        %p271 = scmp.lt.s32.totalorder %s21, 0
        %s272 = scalar_select %p271, %s21, 0
        %p273 = scmp.lt.s32.totalorder %s20, 1
        %s274 = scalar_select %p273, %s20, 1
        %s275 = smul.addr %s272, 2
        %s276 = sadd.s32 %s274, %s275
        %s277 = smul.addr %s276, 8
        %s278 = scalar_lea.vmem %s3, %s277
      $region44: #{unnormalize.1} parent=39 // pred_fallthru
        _
    $region40: #{unnormalize.1} parent=5 // pred_fallthru
      _
  $region6: #{unnormalize.1} parent=0 // loop_footer
    %s13 = sadd.s32 1, %s9
  $region7: #{unnormalize.1} parent=0 // loop_footer_branch
    %8 = sbr.rel target = $region3
  $region8: #{unnormalize.1} parent=0 // loop_exit
    _

</llo_original>
